<compile_context>
chip_gen: v6e
topology: v6e:2x2x1
jax: 0.10.0
libtpu: 0.0.40
codegen_flags: <defaults>
</compile_context>

<pallas_src>
import functools

import jax
import jax.numpy as jnp
from jax.experimental import pallas as pl
from jax.experimental.pallas import tpu as pltpu


# ---------------------------------------------------------------------------
# Packed-parameter slab layout (rows x 128 lanes), all f32. Unused lanes/rows
# are exactly zero. 184 rows = 92 KiB (was 520 rows / 266 KiB).
#   rows [  0,128) : W1   Linear(128,32) weight^T   (cols [0,32))
#   rows [128,160) : W2   Linear(32,16)  weight^T   (32 rows, cols [0,16))
#   rows [160,176) : WH   fused actor|critic head^T (16 rows; cols [0,A)=actor,
#                                                    col A = critic)
#   row   176      : b1   (lanes [0,32))
#   row   177      : b2   (lanes [0,16))
#   row   178      : bh   (lanes [0,A) actor bias, lane A critic bias)
#   rows [179,184) : zero padding (sublane alignment to a multiple of 8)
# ---------------------------------------------------------------------------
_ROW_W1 = 0
_ROW_W2 = 128
_ROW_WH = 160
_ROW_B1 = 176
_ROW_B2 = 177
_ROW_BH = 178
_SLAB_ROWS = 184
_LANES = 128


def pixel_policy_kernel(obs_ref, p_ref, out_ref, *, action_space):
    f32 = jnp.float32
    A = action_space

    # obs rows: 0 = state1, 1 = state2, 2 = uniform u replicated across lanes.
    # state = (state1 + 255 - state2) / (255 * 2)
    x = (obs_ref[0] + 255.0 - obs_ref[1]) * (1.0 / 510.0)        # (TB, 128)
    u = obs_ref[2]                                               # (TB, 128)

    w1 = p_ref[_ROW_W1:_ROW_W1 + 128, :]                         # (128, 128)
    w2 = p_ref[_ROW_W2:_ROW_W2 + 32, :]                          # ( 32, 128)
    wh = p_ref[_ROW_WH:_ROW_WH + 16, :]                          # ( 16, 128)
    b1 = p_ref[_ROW_B1:_ROW_B1 + 1, :]
    b2 = p_ref[_ROW_B2:_ROW_B2 + 1, :]
    bh = p_ref[_ROW_BH:_ROW_BH + 1, :]

    # MLP. Lanes beyond the true widths stay exactly zero by construction, so
    # feeding only the live lanes as LHS (K=32 / K=16) is exact.
    h1 = jnp.maximum(jnp.dot(x, w1, preferred_element_type=f32) + b1, 0.0)
    h2 = jnp.maximum(
        jnp.dot(h1[:, :32], w2, preferred_element_type=f32) + b2, 0.0)
    # Fused actor+critic head: lanes [0,A) = actor logits, lane A = critic value.
    head = jnp.dot(h2[:, :16], wh, preferred_element_type=f32) + bh  # (TB, 128)

    lane = jax.lax.broadcasted_iota(jnp.int32, head.shape, 1)
    actor_mask = lane < A

    # Numerically stable masked log-softmax on full 128-lane vregs.
    logit = jnp.where(actor_mask, head, -1e30)
    m = jnp.max(logit, axis=1, keepdims=True)
    z = logit - m
    denom = jnp.sum(jnp.where(actor_mask, jnp.exp(z), 0.0), axis=1, keepdims=True)
    logp = z - jnp.log(denom)            # valid on actor lanes, ~-1e30 elsewhere
    prob = jnp.exp(logp)                 # EUP exp; exactly 0 off actor lanes

    ent = -jnp.sum(jnp.where(actor_mask, prob * logp, 0.0),
                   axis=1, keepdims=True)                              # (TB, 1)
    v = jnp.sum(jnp.where(lane == A, head, 0.0), axis=1, keepdims=True)

    # multinomial(num_samples=1): inverse-CDF vs. uniform u. The inclusive
    # prefix sum is a matmul against an in-kernel-generated upper-triangular
    # constant (no HBM traffic for it any more).
    row_i = jax.lax.broadcasted_iota(jnp.int32, (_LANES, _LANES), 0)
    col_i = jax.lax.broadcasted_iota(jnp.int32, (_LANES, _LANES), 1)
    tri = (row_i <= col_i).astype(f32)
    csum = jnp.dot(prob, tri, preferred_element_type=f32)              # (TB, 128)
    below = jnp.logical_and(actor_mask, csum < u)
    sel = jnp.minimum(
        jnp.sum(below.astype(jnp.int32), axis=1, keepdims=True), A - 1)  # (TB, 1)

    # log_prob_all.gather(1, selected)
    logp_sel = jnp.sum(jnp.where(lane == sel, logp, 0.0), axis=1, keepdims=True)

    # Single lane-dense (TB,128) output slab:
    #   lanes [0,A)=prob, A=v, A+1=entropy, A+2=log_prob(sel), A+3=sel (as f32;
    #   exact while A < 2^24)
    out = prob
    out = out + jnp.where(lane == A, v, 0.0)
    out = out + jnp.where(lane == A + 1, ent, 0.0)
    out = out + jnp.where(lane == A + 2, logp_sel, 0.0)
    out = out + jnp.where(lane == A + 3, sel.astype(f32), 0.0)
    out_ref[...] = out


def pack_params(w1, b1, w2, b2, wa, ba, wc, bc):
    """Host-side one-time packing of all parameters into a single VMEM slab."""
    A = wa.shape[1]
    slab = jnp.zeros((_SLAB_ROWS, _LANES), jnp.float32)
    slab = slab.at[_ROW_W1:_ROW_W1 + w1.shape[0], :w1.shape[1]].set(w1)
    slab = slab.at[_ROW_W2:_ROW_W2 + w2.shape[0], :w2.shape[1]].set(w2)
    slab = slab.at[_ROW_WH:_ROW_WH + wa.shape[0], :A].set(wa)
    slab = slab.at[_ROW_WH:_ROW_WH + wc.shape[0], A:A + 1].set(wc)
    slab = slab.at[_ROW_B1, :b1.shape[0]].set(b1)
    slab = slab.at[_ROW_B2, :b2.shape[0]].set(b2)
    slab = slab.at[_ROW_BH, :A].set(ba)
    slab = slab.at[_ROW_BH, A].set(bc[0])
    return slab


@functools.partial(jax.jit, static_argnames=("action_space", "tile_b"))
def pixel_policy_forward(slab, state1, state2, u, *, action_space, tile_b=8):
    """Batched forward. Returns (selected, prob, entropy, log_prob, v), each (B, ...)."""
    A = action_space
    assert A + 4 <= _LANES
    B = state1.shape[0]
    n_tiles = pl.cdiv(B, tile_b)
    b_pad = n_tiles * tile_b
    pad = b_pad - B

    s1 = jnp.pad(state1.astype(jnp.float32), ((0, pad), (0, 0)))
    s2 = jnp.pad(state2.astype(jnp.float32), ((0, pad), (0, 0)))
    uu = jnp.pad(u.astype(jnp.float32), ((0, pad), (0, 0)))
    # One lane-dense input slab per call: [state1; state2; u broadcast to lanes].
    obs = jnp.stack(
        [s1, s2, jnp.broadcast_to(uu, (b_pad, _LANES))], axis=0)   # (3, Bp, 128)

    kernel = functools.partial(pixel_policy_kernel, action_space=A)
    out = pl.pallas_call(
        kernel,
        out_shape=jax.ShapeDtypeStruct((b_pad, _LANES), jnp.float32),
        grid=(n_tiles,),
        in_specs=[
            # observations: one tile of TB rows per grid step
            pl.BlockSpec((3, tile_b, _LANES), lambda b: (0, b, 0)),
            # packed params: constant block index -> DMA'd once, VMEM-resident
            pl.BlockSpec((_SLAB_ROWS, _LANES), lambda b: (0, 0)),
        ],
        out_specs=pl.BlockSpec((tile_b, _LANES), lambda b: (b, 0)),
        compiler_params=pltpu.CompilerParams(
            dimension_semantics=("parallel",)),
    )(obs, slab)

    prob = out[:B, :A]
    v = out[:B, A:A + 1]
    ent = out[:B, A + 1:A + 2]
    logp = out[:B, A + 2:A + 3]
    sel = out[:B, A + 3:A + 4].astype(jnp.int32)
    return sel, prob, ent, logp, v


# ---------------------------------------------------------------------------
# Pure-JAX reference (same math as the PyTorch module) for a correctness check.
# ---------------------------------------------------------------------------
def ref_forward(state1, state2, w1, b1, w2, b2, wa, ba, wc, bc):
    x = (state1 + 255.0 - state2) / 510.0
    h1 = jnp.maximum(x @ w1 + b1, 0.0)
    h2 = jnp.maximum(h1 @ w2 + b2, 0.0)
    logit = h2 @ wa + ba
    v = h2 @ wc + bc
    m = jnp.max(logit, axis=1, keepdims=True)
    z = logit - m
    e = jnp.exp(z)
    s = jnp.sum(e, axis=1, keepdims=True)
    prob = e / s
    logp_all = z - jnp.log(s)
    ent = -jnp.sum(prob * logp_all, axis=1, keepdims=True)
    return prob, ent, logp_all, v


def linear_init(kw, kb, fan_in, fan_out):
    bound = 1.0 / jnp.sqrt(jnp.float32(fan_in))
    w = jax.random.uniform(kw, (fan_in, fan_out), jnp.float32, -bound, bound)
    b = jax.random.uniform(kb, (fan_out,), jnp.float32, -bound, bound)
    return w, b


if __name__ == "__main__":
    key = jax.random.PRNGKey(0)
    ks = jax.random.split(key, 9)

    action_space = 6
    action_map = list(range(action_space))   # host-side lookup table (glue)

    # Linear(128,32), Linear(32,16) — weights stored as (in, out).
    w1, b1 = linear_init(ks[0], ks[1], 128, 32)
    w2, b2 = linear_init(ks[2], ks[3], 32, 16)
    # actor: normalized_columns_initializer(0.01), bias 0
    wa = jax.random.normal(ks[4], (16, action_space), jnp.float32)
    wa = 0.01 * wa / jnp.sqrt(jnp.sum(wa * wa, axis=0, keepdims=True))
    ba = jnp.zeros((action_space,), jnp.float32)
    # critic: normalized_columns_initializer(1.0), bias 0
    wc = jax.random.normal(ks[5], (16, 1), jnp.float32)
    wc = 1.0 * wc / jnp.sqrt(jnp.sum(wc * wc, axis=0, keepdims=True))
    bc = jnp.zeros((1,), jnp.float32)

    slab = pack_params(w1, b1, w2, b2, wa, ba, wc, bc)   # packed once, reused

    # A small batch of consecutive 128-byte RAM observation pairs.
    B = 16
    state1 = jax.random.randint(ks[6], (B, 128), 0, 256).astype(jnp.float32)
    state2 = jax.random.randint(ks[7], (B, 128), 0, 256).astype(jnp.float32)
    # Deterministic uniforms driving the multinomial (inverse-CDF) samples.
    u = jax.random.uniform(ks[8], (B, 1), jnp.float32)

    sel, prob, ent, logp, v = pixel_policy_forward(
        slab, state1, state2, u, action_space=action_space)
    jax.block_until_ready((sel, prob, ent, logp, v))

    actions = [action_map[int(s)] for s in sel[:, 0]]    # host-side action_map

    prob_r, ent_r, logp_all_r, v_r = ref_forward(
        state1, state2, w1, b1, w2, b2, wa, ba, wc, bc)
    csum_r = jnp.cumsum(prob_r, axis=1)
    sel_r = jnp.minimum(
        jnp.sum((csum_r < u).astype(jnp.int32), axis=1, keepdims=True),
        action_space - 1)

    assert prob.shape == (B, action_space) and v.shape == (B, 1)
    assert ent.shape == (B, 1) and logp.shape == (B, 1) and sel.shape == (B, 1)
    assert bool(jnp.all((sel >= 0) & (sel < action_space)))
    assert all(0 <= a < action_space for a in actions)
    assert bool(jnp.allclose(jnp.sum(prob, axis=1), 1.0, atol=1e-4))
    assert bool(jnp.allclose(prob, prob_r, atol=1e-5, rtol=1e-4))
    assert bool(jnp.allclose(ent, ent_r, atol=1e-5, rtol=1e-4))
    assert bool(jnp.allclose(v, v_r, atol=1e-5, rtol=1e-4))
    assert bool(jnp.array_equal(sel, sel_r))
    logp_ref_sel = jnp.take_along_axis(logp_all_r, sel, axis=1)
    assert bool(jnp.allclose(logp, logp_ref_sel, atol=1e-5, rtol=1e-4))
    print("KERNEL_OK")
</pallas_src>

<mosaic_0001>
module attributes {stable_mosaic.version = 11 : i64} {
  func.func @pixel_policy_kernel(%arg0: i32, %arg1: memref<3x8x128xf32, #tpu.memory_space<vmem>>, %arg2: memref<184x128xf32, #tpu.memory_space<vmem>>, %arg3: memref<8x128xf32, #tpu.memory_space<vmem>>) attributes {dimension_semantics = [#tpu.dimension_semantics<parallel>], iteration_bounds = array<i64: 2>, scalar_prefetch = 0 : i64, scratch_operands = 0 : i64, tpu.core_type = #tpu.core_type<tc>, window_params = [{transform_indices = @transform_0, window_bounds = array<i64: 3, 8, 128>}, {pipeline_mode = #tpu.pipeline_mode<synchronous>, transform_indices = @transform_1, window_bounds = array<i64: 184, 128>}, {transform_indices = @transform_2, window_bounds = array<i64: 8, 128>}]} {
    %c0 = arith.constant 0 : index
    %c0_0 = arith.constant 0 : index
    %c0_1 = arith.constant 0 : index
    %0 = vector.load %arg1[%c0, %c0_0, %c0_1] : memref<3x8x128xf32, #tpu.memory_space<vmem>>, vector<1x8x128xf32>
    %1 = vector.shape_cast %0 : vector<1x8x128xf32> to vector<8x128xf32>
    %cst = arith.constant 2.550000e+02 : f32
    %2 = vector.broadcast %cst : f32 to vector<8x128xf32>
    %3 = arith.addf %1, %2 : vector<8x128xf32>
    %c1 = arith.constant 1 : index
    %c0_2 = arith.constant 0 : index
    %c0_3 = arith.constant 0 : index
    %4 = vector.load %arg1[%c1, %c0_2, %c0_3] : memref<3x8x128xf32, #tpu.memory_space<vmem>>, vector<1x8x128xf32>
    %5 = vector.shape_cast %4 : vector<1x8x128xf32> to vector<8x128xf32>
    %6 = arith.subf %3, %5 : vector<8x128xf32>
    %cst_4 = arith.constant 0.00196078443 : f32
    %7 = vector.broadcast %cst_4 : f32 to vector<8x128xf32>
    %8 = arith.mulf %6, %7 : vector<8x128xf32>
    %c2 = arith.constant 2 : index
    %c0_5 = arith.constant 0 : index
    %c0_6 = arith.constant 0 : index
    %9 = vector.load %arg1[%c2, %c0_5, %c0_6] : memref<3x8x128xf32, #tpu.memory_space<vmem>>, vector<1x8x128xf32>
    %10 = vector.shape_cast %9 : vector<1x8x128xf32> to vector<8x128xf32>
    %c0_7 = arith.constant 0 : index
    %c0_8 = arith.constant 0 : index
    %11 = vector.load %arg2[%c0_7, %c0_8] : memref<184x128xf32, #tpu.memory_space<vmem>>, vector<128x128xf32>
    %c128 = arith.constant 128 : index
    %c0_9 = arith.constant 0 : index
    %12 = vector.load %arg2[%c128, %c0_9] : memref<184x128xf32, #tpu.memory_space<vmem>>, vector<32x128xf32>
    %c160 = arith.constant 160 : index
    %c0_10 = arith.constant 0 : index
    %13 = vector.load %arg2[%c160, %c0_10] : memref<184x128xf32, #tpu.memory_space<vmem>>, vector<16x128xf32>
    %c176 = arith.constant 176 : index
    %c0_11 = arith.constant 0 : index
    %14 = vector.load %arg2[%c176, %c0_11] : memref<184x128xf32, #tpu.memory_space<vmem>>, vector<1x128xf32>
    %c177 = arith.constant 177 : index
    %c0_12 = arith.constant 0 : index
    %15 = vector.load %arg2[%c177, %c0_12] : memref<184x128xf32, #tpu.memory_space<vmem>>, vector<1x128xf32>
    %c178 = arith.constant 178 : index
    %c0_13 = arith.constant 0 : index
    %16 = vector.load %arg2[%c178, %c0_13] : memref<184x128xf32, #tpu.memory_space<vmem>>, vector<1x128xf32>
    %cst_14 = arith.constant dense<0.000000e+00> : vector<8x128xf32>
    %17 = tpu.matmul %8, %11, %cst_14 {dimension_numbers = #tpu.dot_dimension_numbers<[1], [0], [0], [1], [0, 0, 1, 1], [], []>} : vector<8x128xf32>, vector<128x128xf32>, vector<8x128xf32> -> vector<8x128xf32>
    %18 = vector.broadcast %14 : vector<1x128xf32> to vector<8x128xf32>
    %19 = arith.addf %17, %18 : vector<8x128xf32>
    %cst_15 = arith.constant 0.000000e+00 : f32
    %20 = vector.broadcast %cst_15 : f32 to vector<8x128xf32>
    %21 = arith.maximumf %19, %20 : vector<8x128xf32>
    %22 = vector.extract_strided_slice %21 {offsets = [0, 0], sizes = [8, 32], strides = [1, 1]} : vector<8x128xf32> to vector<8x32xf32>
    %cst_16 = arith.constant dense<0.000000e+00> : vector<8x128xf32>
    %23 = tpu.matmul %22, %12, %cst_16 {dimension_numbers = #tpu.dot_dimension_numbers<[1], [0], [0], [1], [0, 0, 1, 1], [], []>} : vector<8x32xf32>, vector<32x128xf32>, vector<8x128xf32> -> vector<8x128xf32>
    %24 = vector.broadcast %15 : vector<1x128xf32> to vector<8x128xf32>
    %25 = arith.addf %23, %24 : vector<8x128xf32>
    %cst_17 = arith.constant 0.000000e+00 : f32
    %26 = vector.broadcast %cst_17 : f32 to vector<8x128xf32>
    %27 = arith.maximumf %25, %26 : vector<8x128xf32>
    %28 = vector.extract_strided_slice %27 {offsets = [0, 0], sizes = [8, 16], strides = [1, 1]} : vector<8x128xf32> to vector<8x16xf32>
    %cst_18 = arith.constant dense<0.000000e+00> : vector<8x128xf32>
    %29 = tpu.matmul %28, %13, %cst_18 {dimension_numbers = #tpu.dot_dimension_numbers<[1], [0], [0], [1], [0, 0, 1, 1], [], []>} : vector<8x16xf32>, vector<16x128xf32>, vector<8x128xf32> -> vector<8x128xf32>
    %30 = vector.broadcast %16 : vector<1x128xf32> to vector<8x128xf32>
    %31 = arith.addf %29, %30 : vector<8x128xf32>
    %32 = tpu.iota {dimensions = array<i32: 1>} : vector<8x128xi32>
    %c6_i32 = arith.constant 6 : i32
    %33 = vector.broadcast %c6_i32 : i32 to vector<8x128xi32>
    %34 = arith.cmpi slt, %32, %33 : vector<8x128xi32>
    %cst_19 = arith.constant -1.000000e+30 : f32
    %35 = vector.broadcast %cst_19 : f32 to vector<8x128xf32>
    %36 = arith.select %34, %31, %35 : vector<8x128xi1>, vector<8x128xf32>
    %cst_20 = arith.constant dense<0xFF800000> : vector<8xf32>
    %37 = vector.multi_reduction <maximumf>, %36, %cst_20 [1] : vector<8x128xf32> to vector<8xf32>
    %38 = vector.shape_cast %37 : vector<8xf32> to vector<8x1xf32>
    %39 = vector.broadcast %38 : vector<8x1xf32> to vector<8x128xf32>
    %40 = arith.subf %36, %39 : vector<8x128xf32>
    %41 = math.exp %40 : vector<8x128xf32>
    %cst_21 = arith.constant 0.000000e+00 : f32
    %42 = vector.broadcast %cst_21 : f32 to vector<8x128xf32>
    %43 = arith.select %34, %41, %42 : vector<8x128xi1>, vector<8x128xf32>
    %cst_22 = arith.constant dense<0.000000e+00> : vector<8xf32>
    %44 = vector.multi_reduction <add>, %43, %cst_22 [1] : vector<8x128xf32> to vector<8xf32>
    %45 = vector.shape_cast %44 : vector<8xf32> to vector<8x1xf32>
    %46 = math.log %45 : vector<8x1xf32>
    %47 = vector.broadcast %46 : vector<8x1xf32> to vector<8x128xf32>
    %48 = arith.subf %40, %47 : vector<8x128xf32>
    %49 = math.exp %48 : vector<8x128xf32>
    %50 = arith.mulf %49, %48 : vector<8x128xf32>
    %cst_23 = arith.constant 0.000000e+00 : f32
    %51 = vector.broadcast %cst_23 : f32 to vector<8x128xf32>
    %52 = arith.select %34, %50, %51 : vector<8x128xi1>, vector<8x128xf32>
    %cst_24 = arith.constant dense<0.000000e+00> : vector<8xf32>
    %53 = vector.multi_reduction <add>, %52, %cst_24 [1] : vector<8x128xf32> to vector<8xf32>
    %54 = vector.shape_cast %53 : vector<8xf32> to vector<8x1xf32>
    %cst_25 = arith.constant 0.000000e+00 : f32
    %55 = vector.broadcast %cst_25 : f32 to vector<8x1xf32>
    %56 = arith.subf %55, %54 : vector<8x1xf32>
    %c6_i32_26 = arith.constant 6 : i32
    %57 = vector.broadcast %c6_i32_26 : i32 to vector<8x128xi32>
    %58 = arith.cmpi eq, %32, %57 : vector<8x128xi32>
    %cst_27 = arith.constant 0.000000e+00 : f32
    %59 = vector.broadcast %cst_27 : f32 to vector<8x128xf32>
    %60 = arith.select %58, %31, %59 : vector<8x128xi1>, vector<8x128xf32>
    %cst_28 = arith.constant dense<0.000000e+00> : vector<8xf32>
    %61 = vector.multi_reduction <add>, %60, %cst_28 [1] : vector<8x128xf32> to vector<8xf32>
    %62 = vector.shape_cast %61 : vector<8xf32> to vector<8x1xf32>
    %63 = tpu.iota {dimensions = array<i32: 0>} : vector<128x128xi32>
    %64 = tpu.iota {dimensions = array<i32: 1>} : vector<128x128xi32>
    %65 = arith.cmpi sle, %63, %64 : vector<128x128xi32>
    %66 = arith.extui %65 : vector<128x128xi1> to vector<128x128xi32>
    %67 = arith.sitofp %66 : vector<128x128xi32> to vector<128x128xf32>
    %cst_29 = arith.constant dense<0.000000e+00> : vector<8x128xf32>
    %68 = tpu.matmul %49, %67, %cst_29 {dimension_numbers = #tpu.dot_dimension_numbers<[1], [0], [0], [1], [0, 0, 1, 1], [], []>} : vector<8x128xf32>, vector<128x128xf32>, vector<8x128xf32> -> vector<8x128xf32>
    %69 = arith.cmpf olt, %68, %10 : vector<8x128xf32>
    %70 = arith.andi %34, %69 : vector<8x128xi1>
    %71 = arith.extui %70 : vector<8x128xi1> to vector<8x128xi32>
    %cst_30 = arith.constant dense<0> : vector<8xi32>
    %72 = vector.multi_reduction <add>, %71, %cst_30 [1] : vector<8x128xi32> to vector<8xi32>
    %73 = vector.shape_cast %72 : vector<8xi32> to vector<8x1xi32>
    %c5_i32 = arith.constant 5 : i32
    %74 = vector.broadcast %c5_i32 : i32 to vector<8x1xi32>
    %75 = arith.minsi %73, %74 : vector<8x1xi32>
    %76 = vector.broadcast %75 : vector<8x1xi32> to vector<8x128xi32>
    %77 = arith.cmpi eq, %32, %76 : vector<8x128xi32>
    %cst_31 = arith.constant 0.000000e+00 : f32
    %78 = vector.broadcast %cst_31 : f32 to vector<8x128xf32>
    %79 = arith.select %77, %48, %78 : vector<8x128xi1>, vector<8x128xf32>
    %cst_32 = arith.constant dense<0.000000e+00> : vector<8xf32>
    %80 = vector.multi_reduction <add>, %79, %cst_32 [1] : vector<8x128xf32> to vector<8xf32>
    %81 = vector.shape_cast %80 : vector<8xf32> to vector<8x1xf32>
    %c6_i32_33 = arith.constant 6 : i32
    %82 = vector.broadcast %c6_i32_33 : i32 to vector<8x128xi32>
    %83 = arith.cmpi eq, %32, %82 : vector<8x128xi32>
    %cst_34 = arith.constant 0.000000e+00 : f32
    %84 = vector.shape_cast %62 : vector<8x1xf32> to vector<8x1xf32>
    %85 = vector.broadcast %84 : vector<8x1xf32> to vector<8x128xf32>
    %86 = vector.broadcast %cst_34 : f32 to vector<8x128xf32>
    %87 = arith.select %83, %85, %86 : vector<8x128xi1>, vector<8x128xf32>
    %88 = arith.addf %49, %87 : vector<8x128xf32>
    %c7_i32 = arith.constant 7 : i32
    %89 = vector.broadcast %c7_i32 : i32 to vector<8x128xi32>
    %90 = arith.cmpi eq, %32, %89 : vector<8x128xi32>
    %cst_35 = arith.constant 0.000000e+00 : f32
    %91 = vector.shape_cast %56 : vector<8x1xf32> to vector<8x1xf32>
    %92 = vector.broadcast %91 : vector<8x1xf32> to vector<8x128xf32>
    %93 = vector.broadcast %cst_35 : f32 to vector<8x128xf32>
    %94 = arith.select %90, %92, %93 : vector<8x128xi1>, vector<8x128xf32>
    %95 = arith.addf %88, %94 : vector<8x128xf32>
    %c8_i32 = arith.constant 8 : i32
    %96 = vector.broadcast %c8_i32 : i32 to vector<8x128xi32>
    %97 = arith.cmpi eq, %32, %96 : vector<8x128xi32>
    %cst_36 = arith.constant 0.000000e+00 : f32
    %98 = vector.shape_cast %81 : vector<8x1xf32> to vector<8x1xf32>
    %99 = vector.broadcast %98 : vector<8x1xf32> to vector<8x128xf32>
    %100 = vector.broadcast %cst_36 : f32 to vector<8x128xf32>
    %101 = arith.select %97, %99, %100 : vector<8x128xi1>, vector<8x128xf32>
    %102 = arith.addf %95, %101 : vector<8x128xf32>
    %c9_i32 = arith.constant 9 : i32
    %103 = vector.broadcast %c9_i32 : i32 to vector<8x128xi32>
    %104 = arith.cmpi eq, %32, %103 : vector<8x128xi32>
    %105 = arith.sitofp %75 : vector<8x1xi32> to vector<8x1xf32>
    %cst_37 = arith.constant 0.000000e+00 : f32
    %106 = vector.shape_cast %105 : vector<8x1xf32> to vector<8x1xf32>
    %107 = vector.broadcast %106 : vector<8x1xf32> to vector<8x128xf32>
    %108 = vector.broadcast %cst_37 : f32 to vector<8x128xf32>
    %109 = arith.select %104, %107, %108 : vector<8x128xi1>, vector<8x128xf32>
    %110 = arith.addf %102, %109 : vector<8x128xf32>
    %c0_38 = arith.constant 0 : index
    %c0_39 = arith.constant 0 : index
    %111 = vector.load %arg3[%c0_38, %c0_39] : memref<8x128xf32, #tpu.memory_space<vmem>>, vector<8x128xf32>
    tpu.vector_store %arg3[%c0_38, %c0_39], %110 {strides = array<i32>} : memref<8x128xf32, #tpu.memory_space<vmem>>, vector<8x128xf32>,
    return
  }
  func.func @transform_0(%arg0: i32) -> (i32, i32, i32) {
    %c0_i32 = arith.constant 0 : i32
    %c0_i32_0 = arith.constant 0 : i32
    %c0_i32_1 = arith.constant 0 : i32
    return %c0_i32, %arg0, %c0_i32_0 : i32, i32, i32
  }
  func.func @transform_1(%arg0: i32) -> (i32, i32) {
    %c0_i32 = arith.constant 0 : i32
    %c0_i32_0 = arith.constant 0 : i32
    %c0_i32_1 = arith.constant 0 : i32
    return %c0_i32, %c0_i32_0 : i32, i32
  }
  func.func @transform_2(%arg0: i32) -> (i32, i32) {
    %c0_i32 = arith.constant 0 : i32
    %c0_i32_0 = arith.constant 0 : i32
    return %arg0, %c0_i32 : i32, i32
  }
}

</mosaic_0001>

<llo_original>
// kernel: pixel_policy_forward.1
$region0: #{pixel_policy_forward.1}
  #allocation0 [shape = 'u32[]', space=smem, size = 0x4, offset = 0x4, fixed_abs, tag = 'smem constant byte address 0x4 - core index']
  #allocation1 [shape = 'u32[144,128]{1,0:T(1,128)}', space=vmem, size = 0x12000, scoped, tag = 'internal scratch']
  %s0 = inlined_call_operand.vmem [shape: f32[3,16,128], index: 0, kind: input, shape index: {}]
  %s1 = inlined_call_operand.hbm [shape: f32[184,128], index: 1, kind: input, shape index: {}]
  %s2 = inlined_call_operand.vmem [shape: f32[16,128], index: 2, kind: output, shape index: {}]
  %s3 = sld [smem:[#allocation0]]
  $region83: #{pixel_policy_forward.1} parent=0
    _
  %s5 = ssub.s32 1, %s3
  %s6 = scalar_select 0, %s5, %s3
  $region1: #{pixel_policy_forward.1} parent=0
    #allocation2 [shape = 'u8[24576]{0}', space=vmem, size = 0x6000, scoped, tag = 'input window, operand 0']
    #allocation3 [shape = 'u8[94208]{0}', space=vmem, size = 0x17000, scoped, tag = 'input window, operand 1, single buffered']
    #allocation4 [shape = 's32[2]{0}', space=sflag, size = 0x8, scoped, tag = 'scoped memory for pixel_policy_forward.1']
    %7 = vsyncpa [#allocation4], 0
    loop: start=0, step=1, limit=4
    $region2: #{pixel_policy_forward.1} parent=1 // loop_pre_header
      _
    $region3: #{pixel_policy_forward.1} parent=1 // loop_header
      %s9 = sphi 0, %s13
      %p10 = scmp.ge.s32.totalorder %s9, 4
      %s19 = sphi 0, %s21
      %s22 = sphi 0, %s19
      %s23 = sphi 0, %s22
      %s39 = sphi 0, %s23
      %s43 = sphi 0, %s43
      %s45 = sphi 0, %s43
      %s46 = sphi 0, %s45
      %s60 = sphi 0, %s46
      %s66 = sphi 0, %s68
      %s69 = sphi 0, %s66
      %s70 = sphi 0, %s69
      %s86 = sphi 0, %s70
    $region4: #{pixel_policy_forward.1} parent=1 // loop_header_branch
      %12 = sbr.rel (%p10) target = $region8
    $region5: #{pixel_policy_forward.1} parent=1 // loop_body
      %s14 = ssub.s32 %s9, 1
      %s15 = ssub.s32 %s9, 2
      %s16 = sadd.s32 %s9, 1
      %s17 = ssub.s32 %s9, %s16
      %p18 = scmp.eq.s32.totalorder %s17, 0
      %s20 = sadd.s32 %s19, 1
      %s21 = scalar_select %p18, %s19, %s20
      %p24 = pneg %p18
      %p25 = scmp.eq.s32.totalorder %s9, 1
      %p26 = por %p24, %p25
      %p27 = scmp.ne.s32.totalorder %s19, %s22
      %p28 = scmp.eq.s32.totalorder %s9, 0
      %p29 = por %p27, %p28
      %p30 = scmp.ne.s32.totalorder %s19, %s22
      %p31 = scmp.eq.s32.totalorder %s14, 1
      %p32 = por %p30, %p31
      %p33 = scmp.ne.s32.totalorder %s22, %s23
      %p34 = scmp.eq.s32.totalorder %s14, 0
      %p35 = por %p33, %p34
      %p36 = scmp.ne.s32.totalorder %s22, %s23
      %p37 = scmp.eq.s32.totalorder %s15, 1
      %p38 = por %p36, %p37
      %p40 = scmp.ne.s32.totalorder %s23, %s39
      %p41 = scmp.eq.s32.totalorder %s15, 0
      %p42 = por %p40, %p41
      %s44 = sadd.s32 %s43, 1
      %p47 = scmp.eq.s32.totalorder %s9, 1
      %p48 = scmp.ne.s32.totalorder %s43, %s45
      %p49 = scmp.eq.s32.totalorder %s9, 0
      %p50 = por %p48, %p49
      %p51 = scmp.ne.s32.totalorder %s43, %s45
      %p52 = scmp.eq.s32.totalorder %s14, 1
      %p53 = por %p51, %p52
      %p54 = scmp.ne.s32.totalorder %s45, %s46
      %p55 = scmp.eq.s32.totalorder %s14, 0
      %p56 = por %p54, %p55
      %p57 = scmp.ne.s32.totalorder %s45, %s46
      %p58 = scmp.eq.s32.totalorder %s15, 1
      %p59 = por %p57, %p58
      %p61 = scmp.ne.s32.totalorder %s46, %s60
      %p62 = scmp.eq.s32.totalorder %s15, 0
      %p63 = por %p61, %p62
      %s64 = ssub.s32 %s9, %s16
      %p65 = scmp.eq.s32.totalorder %s64, 0
      %s67 = sadd.s32 %s66, 1
      %s68 = scalar_select %p65, %s66, %s67
      %p71 = pneg %p65
      %p72 = scmp.eq.s32.totalorder %s9, 1
      %p73 = por %p71, %p72
      %p74 = scmp.ne.s32.totalorder %s66, %s69
      %p75 = scmp.eq.s32.totalorder %s9, 0
      %p76 = por %p74, %p75
      %p77 = scmp.ne.s32.totalorder %s66, %s69
      %p78 = scmp.eq.s32.totalorder %s14, 1
      %p79 = por %p77, %p78
      %p80 = scmp.ne.s32.totalorder %s69, %s70
      %p81 = scmp.eq.s32.totalorder %s14, 0
      %p82 = por %p80, %p81
      %p83 = scmp.ne.s32.totalorder %s69, %s70
      %p84 = scmp.eq.s32.totalorder %s15, 1
      %p85 = por %p83, %p84
      %p87 = scmp.ne.s32.totalorder %s70, %s86
      %p88 = scmp.eq.s32.totalorder %s15, 0
      %p89 = por %p87, %p88
      %p90 = scmp.le.s32.totalorder 1, %s9
      %p91 = scmp.lt.s32.totalorder %s9, 3
      %p92 = pnand %p90, %p91
      %p93 = pneg %p92
      // Predicated region
      $region9: #{pixel_policy_forward.1} parent=5 // pred_check
        _
      $region10: #{pixel_policy_forward.1} parent=5 // pred_check_branch
        %95 = sbr.rel (%p92) target = $region12
      $region11: #{pixel_policy_forward.1} parent=5 // pred_region
        %s96 = ssub.s32 %s9, 1
        // Predicated region
        $region13: #{pixel_policy_forward.1} parent=11 // pred_check
          %p97 = pneg %p56
        $region14: #{pixel_policy_forward.1} parent=11 // pred_check_branch
          %99 = sbr.rel (%p97) target = $region16
        $region15: #{pixel_policy_forward.1} parent=11 // pred_region
          %s101 = ssub.s32 2944, 2944
          %102 = vsyncadd [#allocation4], %s101
          %s103 = sshll.u32 [#allocation3], 4
          %s104 = int_to_ptr.vmem [resolvable:$true] %s103
          %109 = dma.hbm_to_vmem [thread:$0]  %s1, 2944, %s104, [#allocation4], 128, 128, 8
        $region16: #{pixel_policy_forward.1} parent=11 // pred_fallthru
          _
      $region12: #{pixel_policy_forward.1} parent=5 // pred_fallthru
        _
      %p110 = scmp.lt.s32.totalorder %s9, 2
      // Predicated region
      $region17: #{pixel_policy_forward.1} parent=5 // pred_check
        %p111 = pneg %p110
      $region18: #{pixel_policy_forward.1} parent=5 // pred_check_branch
        %113 = sbr.rel (%p111) target = $region20
      $region19: #{pixel_policy_forward.1} parent=5 // pred_region
        // Predicated region
        $region21: #{pixel_policy_forward.1} parent=19 // pred_check
          %p114 = pneg %p29
        $region22: #{pixel_policy_forward.1} parent=19 // pred_check_branch
          %116 = sbr.rel (%p114) target = $region24
        $region23: #{pixel_policy_forward.1} parent=19 // pred_region
          %s117 = sand.u32 %s19, 1
          %s118 = sand.u32 %s19, 1
          %s119 = smul.addr %s118, 24
          %s120 = scalar_lea.vmem [#allocation2], %s119
          %s121 = smul.addr %s9, 8
          %s122 = scalar_lea.vmem %s0, %s121
          // Predicated region
          $region25: #{pixel_policy_forward.1} parent=23 // pred_check
            _
          $region26: #{pixel_policy_forward.1} parent=23 // pred_check_branch
            %124 = sbr.rel (0) target = $region28
          $region27: #{pixel_policy_forward.1} parent=23 // pred_region
            // Predicated region
            $region29: #{pixel_policy_forward.1} parent=27 // pred_check
              _
            $region30: #{pixel_policy_forward.1} parent=27 // pred_check_branch
              %126 = sbr.rel (0) target = $region32
            $region31: #{pixel_policy_forward.1} parent=27 // pred_region
              // Predicated region
              $region44: #{pixel_policy_forward.1} parent=31 // pred_check
                _
              $region45: #{pixel_policy_forward.1} parent=31 // pred_check_branch
                %146 = sbr.rel (0) target = $region47
              $region46: #{pixel_policy_forward.1} parent=31 // pred_region
                loop: start=0, step=1, limit=1
                $region48: #{pixel_policy_forward.1} parent=46 // loop_pre_header
                  _
                $region49: #{pixel_policy_forward.1} parent=46 // loop_header
                  %s148 = sphi 0, %s152
                  %p149 = scmp.ge.s32.totalorder %s148, 1
                  %s153 = sphi %s122, %s122
                  %s154 = sphi %s120, %s120
                $region50: #{pixel_policy_forward.1} parent=46 // loop_header_branch
                  %151 = sbr.rel (%p149) target = $region54
                $region51: #{pixel_policy_forward.1} parent=46 // loop_body
                  %v155 = vld [vmem:[%s153] sm:$0xff]
                  %156 = vst [vmem:[%s154] sm:$0xff] %v155
                  %v157 = vld [vmem:[%s153 + $0x10] sm:$0xff]
                  %158 = vst [vmem:[%s154 + $0x8] sm:$0xff] %v157
                  %v159 = vld [vmem:[%s153 + $0x20] sm:$0xff]
                  %160 = vst [vmem:[%s154 + $0x10] sm:$0xff] %v159
                $region52: #{pixel_policy_forward.1} parent=46 // loop_footer
                  %s152 = sadd.s32 1, %s148
                $region53: #{pixel_policy_forward.1} parent=46 // loop_footer_branch
                  %147 = sbr.rel target = $region49
                $region54: #{pixel_policy_forward.1} parent=46 // loop_exit
                  _
              $region47: #{pixel_policy_forward.1} parent=31 // pred_fallthru
                _
              // Predicated region
              $region55: #{pixel_policy_forward.1} parent=31 // pred_check
                _
              $region56: #{pixel_policy_forward.1} parent=31 // pred_check_branch
                %162 = sbr.rel target = $region58
              $region57: #{pixel_policy_forward.1} parent=31 // pred_region
                _
              $region58: #{pixel_policy_forward.1} parent=31 // pred_fallthru
                _
            $region32: #{pixel_policy_forward.1} parent=27 // pred_fallthru
              _
            // Predicated region
            $region33: #{pixel_policy_forward.1} parent=27 // pred_check
              _
            $region34: #{pixel_policy_forward.1} parent=27 // pred_check_branch
              %128 = sbr.rel target = $region36
            $region35: #{pixel_policy_forward.1} parent=27 // pred_region
              %s130 = ssub.s32 256, 1
              loop: start=0, step=1, limit=1
              $region37: #{pixel_policy_forward.1} parent=35 // loop_pre_header
                _
              $region38: #{pixel_policy_forward.1} parent=35 // loop_header
                %s132 = sphi 0, %s136
                %p133 = scmp.ge.s32.totalorder %s132, 1
                %s137 = sphi %s122, %s122
                %s138 = sphi %s120, %s120
              $region39: #{pixel_policy_forward.1} parent=35 // loop_header_branch
                %135 = sbr.rel (%p133) target = $region43
              $region40: #{pixel_policy_forward.1} parent=35 // loop_body
                %v139 = vld [vmem:[%s137] sm:%s130]
                %140 = vst [vmem:[%s138] sm:%s130] %v139
                %v141 = vld [vmem:[%s137 + $0x10] sm:%s130]
                %142 = vst [vmem:[%s138 + $0x8] sm:%s130] %v141
                %v143 = vld [vmem:[%s137 + $0x20] sm:%s130]
                %144 = vst [vmem:[%s138 + $0x10] sm:%s130] %v143
              $region41: #{pixel_policy_forward.1} parent=35 // loop_footer
                %s136 = sadd.s32 1, %s132
              $region42: #{pixel_policy_forward.1} parent=35 // loop_footer_branch
                %131 = sbr.rel target = $region38
              $region43: #{pixel_policy_forward.1} parent=35 // loop_exit
                _
            $region36: #{pixel_policy_forward.1} parent=27 // pred_fallthru
              _
          $region28: #{pixel_policy_forward.1} parent=23 // pred_fallthru
            _
          %163 = vnop
        $region24: #{pixel_policy_forward.1} parent=19 // pred_fallthru
          _
      $region20: #{pixel_policy_forward.1} parent=5 // pred_fallthru
        _
      %p164 = scmp.le.s32.totalorder 1, %s9
      %p165 = scmp.lt.s32.totalorder %s9, 3
      %p166 = pnand %p164, %p165
      %p167 = pneg %p166
      // Predicated region
      $region59: #{pixel_policy_forward.1} parent=5 // pred_check
        _
      $region60: #{pixel_policy_forward.1} parent=5 // pred_check_branch
        %169 = sbr.rel (%p166) target = $region62
      $region61: #{pixel_policy_forward.1} parent=5 // pred_region
        %s170 = ssub.s32 %s9, 1
        %s171 = sand.u32 %s22, 1
        %s172 = sand.u32 %s22, 1
        %s173 = smul.addr %s172, 24
        %s174 = scalar_lea.vmem [#allocation2], %s173
        // Predicated region
        $region63: #{pixel_policy_forward.1} parent=61 // pred_check
          %p175 = pneg %p35
        $region64: #{pixel_policy_forward.1} parent=61 // pred_check_branch
          %177 = sbr.rel (%p175) target = $region66
        $region65: #{pixel_policy_forward.1} parent=61 // pred_region
          _
        $region66: #{pixel_policy_forward.1} parent=61 // pred_fallthru
          _
        // Predicated region
        $region67: #{pixel_policy_forward.1} parent=61 // pred_check
          %p178 = pneg %p56
        $region68: #{pixel_policy_forward.1} parent=61 // pred_check_branch
          %180 = sbr.rel (%p178) target = $region70
        $region69: #{pixel_policy_forward.1} parent=61 // pred_region
          %181 = dma.done [#allocation4], 2944
        $region70: #{pixel_policy_forward.1} parent=61 // pred_fallthru
          _
        %s182 = sand.u32 %s22, 1
        %s183 = sand.u32 %s22, 1
        %s184 = smul.addr %s183, 24
        %s185 = scalar_lea.vmem [#allocation2], %s184
        %p186 = pneg %p35
        %p187 = pneg %p32
        %p188 = pneg %p56
        %p189 = pneg %p53
        %p190 = pneg %p82
        %p191 = pneg %p79
        %p192 = scmp.lt.s32.totalorder %s14, 1
        %s193 = scalar_select %p192, %s14, 1
        %s194 = smul.addr %s193, 8
        %s195 = scalar_lea.vmem %s2, %s194
        %p196 = scmp.lt.s32.totalorder %s14, 1
        %s197 = scalar_select %p196, %s14, 1
        %s198 = smul.addr %s197, 8
        %s199 = scalar_lea.vmem %s2, %s198
        %v200 = vld [vmem:[%s174] sm:$0xff]
        %v201 = vadd.f32 %v200, 255.0
        %s202 = scalar_lea.vmem %s174, 8 [#allocation2]
        %v203 = vld [vmem:[%s202] sm:$0xff]
        %v204 = vsub.f32 %v201, %v203
        %v205 = vmul.f32 %v204, 0.0019607844
        %s206 = scalar_lea.vmem %s174, 16 [#allocation2]
        %v207 = vld [vmem:[%s206] sm:$0xff]
        %v208 = vld [vmem:[#allocation3] sm:$0xff]
        %v209 = vld [vmem:[#allocation3 + $0x8] sm:$0xff]
        %v210 = vld [vmem:[#allocation3 + $0x10] sm:$0xff]
        %v211 = vld [vmem:[#allocation3 + $0x18] sm:$0xff]
        %v212 = vld [vmem:[#allocation3 + $0x20] sm:$0xff]
        %v213 = vld [vmem:[#allocation3 + $0x28] sm:$0xff]
        %v214 = vld [vmem:[#allocation3 + $0x30] sm:$0xff]
        %v215 = vld [vmem:[#allocation3 + $0x38] sm:$0xff]
        %v216 = vld [vmem:[#allocation3 + $0x40] sm:$0xff]
        %v217 = vld [vmem:[#allocation3 + $0x48] sm:$0xff]
        %v218 = vld [vmem:[#allocation3 + $0x50] sm:$0xff]
        %v219 = vld [vmem:[#allocation3 + $0x58] sm:$0xff]
        %v220 = vld [vmem:[#allocation3 + $0x60] sm:$0xff]
        %v221 = vld [vmem:[#allocation3 + $0x68] sm:$0xff]
        %v222 = vld [vmem:[#allocation3 + $0x70] sm:$0xff]
        %v223 = vld [vmem:[#allocation3 + $0x78] sm:$0xff]
        %v224 = vld [vmem:[#allocation3 + $0x80] sm:$0xff]
        %v225 = vld [vmem:[#allocation3 + $0x88] sm:$0xff]
        %v226 = vld [vmem:[#allocation3 + $0x90] sm:$0xff]
        %v227 = vld [vmem:[#allocation3 + $0x98] sm:$0xff]
        %v228 = vld [vmem:[#allocation3 + $0xa0] sm:$0xff]
        %v229 = vld [vmem:[#allocation3 + $0xa8] sm:$0xff]
        %v230 = vld [vmem:[#allocation3 + $0xb0] sm:$0x1]
        %v231 = vld [vmem:[#allocation3 + $0xb1] sm:$0x1]
        %v232 = vld [vmem:[#allocation3 + $0xb2] sm:$0x1]
        %v233 = vlaneseq
        %v234 = vshrl.u32 %v233, 7
        %v235 = vsub.s32 0, %v234
        %v236 = vrot.slane %v230, %v235
        %237 = vmatprep.subr.mxu0 0.0
        %238 = vmatpush1.msra.mxu0 %v223
        %239 = vmatprep.subr.mxu0 0.0
        %240 = vmatpush1.msra.mxu0 %v222
        %241 = vmatprep.subr.mxu0 0.0
        %242 = vmatpush1.msra.mxu0 %v221
        %243 = vmatprep.subr.mxu0 0.0
        %244 = vmatpush1.msra.mxu0 %v220
        %245 = vmatprep.subr.mxu0 0.0
        %246 = vmatpush1.msra.mxu0 %v219
        %247 = vmatprep.subr.mxu0 0.0
        %248 = vmatpush1.msra.mxu0 %v218
        %249 = vmatprep.subr.mxu0 0.0
        %250 = vmatpush1.msra.mxu0 %v217
        %251 = vmatprep.subr.mxu0 0.0
        %252 = vmatpush1.msra.mxu0 %v216
        %253 = vmatprep.subr.mxu0 0.0
        %254 = vmatpush1.msra.mxu0 %v215
        %255 = vmatprep.subr.mxu0 0.0
        %256 = vmatpush1.msra.mxu0 %v214
        %257 = vmatprep.subr.mxu0 0.0
        %258 = vmatpush1.msra.mxu0 %v213
        %259 = vmatprep.subr.mxu0 0.0
        %260 = vmatpush1.msra.mxu0 %v212
        %261 = vmatprep.subr.mxu0 0.0
        %262 = vmatpush1.msra.mxu0 %v211
        %263 = vmatprep.subr.mxu0 0.0
        %264 = vmatpush1.msra.mxu0 %v210
        %265 = vmatprep.subr.mxu0 0.0
        %266 = vmatpush1.msra.mxu0 %v209
        %267 = vmatprep.subr.mxu0 0.0
        %268 = vmatpush1.msra.mxu0 %v208
        %269 = vmatprep.subr.mxu0 0.0
        %270 = vmatpush2.msra.mxu0 0.0
        %271 = vmatprep.subr.mxu0 0.0
        %272 = vmatpush2.msra.mxu0 0.0
        %273 = vmatprep.subr.mxu0 0.0
        %274 = vmatpush2.msra.mxu0 0.0
        %275 = vmatprep.subr.mxu0 0.0
        %276 = vmatpush2.msra.mxu0 0.0
        %277 = vmatprep.subr.mxu0 0.0
        %278 = vmatpush2.msra.mxu0 0.0
        %279 = vmatprep.subr.mxu0 0.0
        %280 = vmatpush2.msra.mxu0 0.0
        %281 = vmatprep.subr.mxu0 0.0
        %282 = vmatpush2.msra.mxu0 0.0
        %283 = vmatprep.subr.mxu0 0.0
        %284 = vmatpush2.msra.mxu0 0.0
        %285 = vmatprep.subr.mxu0 0.0
        %286 = vmatpush2.msra.mxu0 0.0
        %287 = vmatprep.subr.mxu0 0.0
        %288 = vmatpush2.msra.mxu0 0.0
        %289 = vmatprep.subr.mxu0 0.0
        %290 = vmatpush2.msra.mxu0 0.0
        %291 = vmatprep.subr.mxu0 0.0
        %292 = vmatpush2.msra.mxu0 0.0
        %293 = vmatprep.subr.mxu0 0.0
        %294 = vmatpush2.msra.mxu0 0.0
        %295 = vmatprep.subr.mxu0 0.0
        %296 = vmatpush2.msra.mxu0 0.0
        %297 = vmatprep.subr.mxu0 0.0
        %298 = vmatpush2.msra.mxu0 0.0
        %299 = vmatprep.subr.mxu0 0.0
        %300 = vmatpush2.msra.mxu0 0.0
        %301 = vmatprep.mubr.f32.mxu0 0.0
        %302 = vmatmul.mubr.f32.gmra.mxu0 %v205
        %v303 = vpop.f32.mrf.mxu0
        %v304 = vadd.f32 %v236, %v303
        %v305 = vpop.f32.mrf.mxu0
        %306 = vdwg.mxu0
        %v307 = vmax.f32 %v304, 0.0
        %v308 = vlaneseq
        %v309 = vshrl.u32 %v308, 7
        %v310 = vsub.s32 0, %v309
        %v311 = vrot.slane %v231, %v310
        %vm312 = vcmask 261120
        %v314 = vsel %vm312, %v307, 0
        %316 = vmatprep.subr.mxu0 0.0
        %317 = vmatpush1.msra.mxu0 0.0
        %318 = vmatprep.subr.mxu0 0.0
        %319 = vmatpush1.msra.mxu0 0.0
        %320 = vmatprep.subr.mxu0 0.0
        %321 = vmatpush1.msra.mxu0 0.0
        %322 = vmatprep.subr.mxu0 0.0
        %323 = vmatpush1.msra.mxu0 0.0
        %324 = vmatprep.subr.mxu0 0.0
        %325 = vmatpush1.msra.mxu0 0.0
        %326 = vmatprep.subr.mxu0 0.0
        %327 = vmatpush1.msra.mxu0 0.0
        %328 = vmatprep.subr.mxu0 0.0
        %329 = vmatpush1.msra.mxu0 0.0
        %330 = vmatprep.subr.mxu0 0.0
        %331 = vmatpush1.msra.mxu0 0.0
        %332 = vmatprep.subr.mxu0 0.0
        %333 = vmatpush1.msra.mxu0 0.0
        %334 = vmatprep.subr.mxu0 0.0
        %335 = vmatpush1.msra.mxu0 0.0
        %336 = vmatprep.subr.mxu0 0.0
        %337 = vmatpush1.msra.mxu0 0.0
        %338 = vmatprep.subr.mxu0 0.0
        %339 = vmatpush1.msra.mxu0 0.0
        %340 = vmatprep.subr.mxu0 0.0
        %341 = vmatpush1.msra.mxu0 %v227
        %342 = vmatprep.subr.mxu0 0.0
        %343 = vmatpush1.msra.mxu0 %v226
        %344 = vmatprep.subr.mxu0 0.0
        %345 = vmatpush1.msra.mxu0 %v225
        %346 = vmatprep.subr.mxu0 0.0
        %347 = vmatpush1.msra.mxu0 %v224
        %348 = vmatprep.subr.mxu0 0.0
        %349 = vmatpush2.msra.mxu0 0.0
        %350 = vmatprep.subr.mxu0 0.0
        %351 = vmatpush2.msra.mxu0 0.0
        %352 = vmatprep.subr.mxu0 0.0
        %353 = vmatpush2.msra.mxu0 0.0
        %354 = vmatprep.subr.mxu0 0.0
        %355 = vmatpush2.msra.mxu0 0.0
        %356 = vmatprep.subr.mxu0 0.0
        %357 = vmatpush2.msra.mxu0 0.0
        %358 = vmatprep.subr.mxu0 0.0
        %359 = vmatpush2.msra.mxu0 0.0
        %360 = vmatprep.subr.mxu0 0.0
        %361 = vmatpush2.msra.mxu0 0.0
        %362 = vmatprep.subr.mxu0 0.0
        %363 = vmatpush2.msra.mxu0 0.0
        %364 = vmatprep.subr.mxu0 0.0
        %365 = vmatpush2.msra.mxu0 0.0
        %366 = vmatprep.subr.mxu0 0.0
        %367 = vmatpush2.msra.mxu0 0.0
        %368 = vmatprep.subr.mxu0 0.0
        %369 = vmatpush2.msra.mxu0 0.0
        %370 = vmatprep.subr.mxu0 0.0
        %371 = vmatpush2.msra.mxu0 0.0
        %372 = vmatprep.subr.mxu0 0.0
        %373 = vmatpush2.msra.mxu0 0.0
        %374 = vmatprep.subr.mxu0 0.0
        %375 = vmatpush2.msra.mxu0 0.0
        %376 = vmatprep.subr.mxu0 0.0
        %377 = vmatpush2.msra.mxu0 0.0
        %378 = vmatprep.subr.mxu0 0.0
        %379 = vmatpush2.msra.mxu0 0.0
        %380 = vmatprep.mubr.f32.mxu0 0.0
        %381 = vmatmul.mubr.f32.gmra.mxu0 %v314
        %v382 = vpop.f32.mrf.mxu0
        %v383 = vadd.f32 %v311, %v382
        %v384 = vpop.f32.mrf.mxu0
        %385 = vdwg.mxu0
        %v386 = vmax.f32 %v383, 0.0
        %v387 = vlaneseq
        %v388 = vshrl.u32 %v387, 7
        %v389 = vsub.s32 0, %v388
        %v390 = vrot.slane %v232, %v389
        %vm391 = vcmask 130048
        %v393 = vsel %vm391, %v386, 0
        %395 = vmatprep.subr.mxu0 0.0
        %396 = vmatpush1.msra.mxu0 0.0
        %397 = vmatprep.subr.mxu0 0.0
        %398 = vmatpush1.msra.mxu0 0.0
        %399 = vmatprep.subr.mxu0 0.0
        %400 = vmatpush1.msra.mxu0 0.0
        %401 = vmatprep.subr.mxu0 0.0
        %402 = vmatpush1.msra.mxu0 0.0
        %403 = vmatprep.subr.mxu0 0.0
        %404 = vmatpush1.msra.mxu0 0.0
        %405 = vmatprep.subr.mxu0 0.0
        %406 = vmatpush1.msra.mxu0 0.0
        %407 = vmatprep.subr.mxu0 0.0
        %408 = vmatpush1.msra.mxu0 0.0
        %409 = vmatprep.subr.mxu0 0.0
        %410 = vmatpush1.msra.mxu0 0.0
        %411 = vmatprep.subr.mxu0 0.0
        %412 = vmatpush1.msra.mxu0 0.0
        %413 = vmatprep.subr.mxu0 0.0
        %414 = vmatpush1.msra.mxu0 0.0
        %415 = vmatprep.subr.mxu0 0.0
        %416 = vmatpush1.msra.mxu0 0.0
        %417 = vmatprep.subr.mxu0 0.0
        %418 = vmatpush1.msra.mxu0 0.0
        %419 = vmatprep.subr.mxu0 0.0
        %420 = vmatpush1.msra.mxu0 0.0
        %421 = vmatprep.subr.mxu0 0.0
        %422 = vmatpush1.msra.mxu0 0.0
        %423 = vmatprep.subr.mxu0 0.0
        %424 = vmatpush1.msra.mxu0 %v229
        %425 = vmatprep.subr.mxu0 0.0
        %426 = vmatpush1.msra.mxu0 %v228
        %427 = vmatprep.subr.mxu0 0.0
        %428 = vmatpush2.msra.mxu0 0.0
        %429 = vmatprep.subr.mxu0 0.0
        %430 = vmatpush2.msra.mxu0 0.0
        %431 = vmatprep.subr.mxu0 0.0
        %432 = vmatpush2.msra.mxu0 0.0
        %433 = vmatprep.subr.mxu0 0.0
        %434 = vmatpush2.msra.mxu0 0.0
        %435 = vmatprep.subr.mxu0 0.0
        %436 = vmatpush2.msra.mxu0 0.0
        %437 = vmatprep.subr.mxu0 0.0
        %438 = vmatpush2.msra.mxu0 0.0
        %439 = vmatprep.subr.mxu0 0.0
        %440 = vmatpush2.msra.mxu0 0.0
        %441 = vmatprep.subr.mxu0 0.0
        %442 = vmatpush2.msra.mxu0 0.0
        %443 = vmatprep.subr.mxu0 0.0
        %444 = vmatpush2.msra.mxu0 0.0
        %445 = vmatprep.subr.mxu0 0.0
        %446 = vmatpush2.msra.mxu0 0.0
        %447 = vmatprep.subr.mxu0 0.0
        %448 = vmatpush2.msra.mxu0 0.0
        %449 = vmatprep.subr.mxu0 0.0
        %450 = vmatpush2.msra.mxu0 0.0
        %451 = vmatprep.subr.mxu0 0.0
        %452 = vmatpush2.msra.mxu0 0.0
        %453 = vmatprep.subr.mxu0 0.0
        %454 = vmatpush2.msra.mxu0 0.0
        %455 = vmatprep.subr.mxu0 0.0
        %456 = vmatpush2.msra.mxu0 0.0
        %457 = vmatprep.subr.mxu0 0.0
        %458 = vmatpush2.msra.mxu0 0.0
        %459 = vmatprep.mubr.f32.mxu0 0.0
        %460 = vmatmul.mubr.f32.gmra.mxu0 %v393
        %v461 = vpop.f32.mrf.mxu0
        %v462 = vadd.f32 %v390, %v461
        %v463 = vpop.f32.mrf.mxu0
        %464 = vdwg.mxu0
        %v465 = vlaneseq
        %v466 = vand.u32 %v465, 127
        %vm467 = vcmp.lt.s32.totalorder %v466, 6
        %v468 = vsel %vm467, %v462, -1e+30
        %469 = vmax.xlane.f32.xlu0 %v468
        %v470 = vpop.xlane.xlu0 %469
        %v471 = vsub.f32 %v468, %v470
        %v472 = vmul.f32 %v471, 1.442695
        %v473 = vpow.pop %v472
        %v474 = vsel %vm467, %v473, 0.0
        %475 = vadd.xlane.f32.xlu0 %v474
        %v476 = vpop.xlane.xlu0 %475
        %v477 = vlog2.pop %v476
        %v478 = vmul.f32 %v477, 0.6931472
        %v479 = vsub.f32 %v471, %v478
        %v480 = vmul.f32 %v479, 1.442695
        %v481 = vpow.pop %v480
        %v482 = vmul.f32 %v481, %v479
        %v483 = vsel %vm467, %v482, 0.0
        %484 = vadd.xlane.f32.xlu0 %v483
        %v485 = vpop.xlane.xlu0 %484
        %v486 = vsub.f32 0.0, %v485
        %vm487 = vcmp.eq.s32.totalorder %v466, 6
        %v488 = vsel %vm487, %v462, 0.0
        %489 = vadd.xlane.f32.xlu0 %v488
        %v490 = vpop.xlane.xlu0 %489
        %v491 = vlaneseq
        %v492 = vshrl.u32 %v491, 7
        %v493 = vadd.s32 %v492, 8
        %v494 = vadd.s32 %v492, 16
        %v495 = vadd.s32 %v492, 24
        %v496 = vadd.s32 %v492, 32
        %v497 = vadd.s32 %v492, 40
        %v498 = vadd.s32 %v492, 48
        %v499 = vadd.s32 %v492, 56
        %v500 = vadd.s32 %v492, 64
        %v501 = vadd.s32 %v492, 72
        %v502 = vadd.s32 %v492, 80
        %v503 = vadd.s32 %v492, 88
        %v504 = vadd.s32 %v492, 96
        %v505 = vadd.s32 %v492, 104
        %v506 = vadd.s32 %v492, 112
        %v507 = vadd.s32 %v492, 120
        %vm508 = vcmp.le.s32.totalorder %v492, %v466
        %vm509 = vcmp.le.s32.totalorder %v493, %v466
        %vm510 = vcmp.le.s32.totalorder %v494, %v466
        %vm511 = vcmp.le.s32.totalorder %v495, %v466
        %vm512 = vcmp.le.s32.totalorder %v496, %v466
        %vm513 = vcmp.le.s32.totalorder %v497, %v466
        %vm514 = vcmp.le.s32.totalorder %v498, %v466
        %vm515 = vcmp.le.s32.totalorder %v499, %v466
        %vm516 = vcmp.le.s32.totalorder %v500, %v466
        %vm517 = vcmp.le.s32.totalorder %v501, %v466
        %vm518 = vcmp.le.s32.totalorder %v502, %v466
        %vm519 = vcmp.le.s32.totalorder %v503, %v466
        %vm520 = vcmp.le.s32.totalorder %v504, %v466
        %vm521 = vcmp.le.s32.totalorder %v505, %v466
        %vm522 = vcmp.le.s32.totalorder %v506, %v466
        %vm523 = vcmp.le.s32.totalorder %v507, %v466
        %v524 = vsel %vm508, 1, 0
        %v525 = vsel %vm509, 1, 0
        %v526 = vsel %vm510, 1, 0
        %v527 = vsel %vm511, 1, 0
        %v528 = vsel %vm512, 1, 0
        %v529 = vsel %vm513, 1, 0
        %v530 = vsel %vm514, 1, 0
        %v531 = vsel %vm515, 1, 0
        %v532 = vsel %vm516, 1, 0
        %v533 = vsel %vm517, 1, 0
        %v534 = vsel %vm518, 1, 0
        %v535 = vsel %vm519, 1, 0
        %v536 = vsel %vm520, 1, 0
        %v537 = vsel %vm521, 1, 0
        %v538 = vsel %vm522, 1, 0
        %v539 = vsel %vm523, 1, 0
        %v540 = vcvt.s32.f32 %v524
        %v541 = vcvt.s32.f32 %v525
        %v542 = vcvt.s32.f32 %v526
        %v543 = vcvt.s32.f32 %v527
        %v544 = vcvt.s32.f32 %v528
        %v545 = vcvt.s32.f32 %v529
        %v546 = vcvt.s32.f32 %v530
        %v547 = vcvt.s32.f32 %v531
        %v548 = vcvt.s32.f32 %v532
        %v549 = vcvt.s32.f32 %v533
        %v550 = vcvt.s32.f32 %v534
        %v551 = vcvt.s32.f32 %v535
        %v552 = vcvt.s32.f32 %v536
        %v553 = vcvt.s32.f32 %v537
        %v554 = vcvt.s32.f32 %v538
        %v555 = vcvt.s32.f32 %v539
        %556 = vmatprep.subr.mxu0 0.0
        %557 = vmatpush1.msra.mxu0 %v555
        %558 = vmatprep.subr.mxu0 0.0
        %559 = vmatpush1.msra.mxu0 %v554
        %560 = vmatprep.subr.mxu0 0.0
        %561 = vmatpush1.msra.mxu0 %v553
        %562 = vmatprep.subr.mxu0 0.0
        %563 = vmatpush1.msra.mxu0 %v552
        %564 = vmatprep.subr.mxu0 0.0
        %565 = vmatpush1.msra.mxu0 %v551
        %566 = vmatprep.subr.mxu0 0.0
        %567 = vmatpush1.msra.mxu0 %v550
        %568 = vmatprep.subr.mxu0 0.0
        %569 = vmatpush1.msra.mxu0 %v549
        %570 = vmatprep.subr.mxu0 0.0
        %571 = vmatpush1.msra.mxu0 %v548
        %572 = vmatprep.subr.mxu0 0.0
        %573 = vmatpush1.msra.mxu0 %v547
        %574 = vmatprep.subr.mxu0 0.0
        %575 = vmatpush1.msra.mxu0 %v546
        %576 = vmatprep.subr.mxu0 0.0
        %577 = vmatpush1.msra.mxu0 %v545
        %578 = vmatprep.subr.mxu0 0.0
        %579 = vmatpush1.msra.mxu0 %v544
        %580 = vmatprep.subr.mxu0 0.0
        %581 = vmatpush1.msra.mxu0 %v543
        %582 = vmatprep.subr.mxu0 0.0
        %583 = vmatpush1.msra.mxu0 %v542
        %584 = vmatprep.subr.mxu0 0.0
        %585 = vmatpush1.msra.mxu0 %v541
        %586 = vmatprep.subr.mxu0 0.0
        %587 = vmatpush1.msra.mxu0 %v540
        %588 = vmatprep.subr.mxu0 0.0
        %589 = vmatpush2.msra.mxu0 0.0
        %590 = vmatprep.subr.mxu0 0.0
        %591 = vmatpush2.msra.mxu0 0.0
        %592 = vmatprep.subr.mxu0 0.0
        %593 = vmatpush2.msra.mxu0 0.0
        %594 = vmatprep.subr.mxu0 0.0
        %595 = vmatpush2.msra.mxu0 0.0
        %596 = vmatprep.subr.mxu0 0.0
        %597 = vmatpush2.msra.mxu0 0.0
        %598 = vmatprep.subr.mxu0 0.0
        %599 = vmatpush2.msra.mxu0 0.0
        %600 = vmatprep.subr.mxu0 0.0
        %601 = vmatpush2.msra.mxu0 0.0
        %602 = vmatprep.subr.mxu0 0.0
        %603 = vmatpush2.msra.mxu0 0.0
        %604 = vmatprep.subr.mxu0 0.0
        %605 = vmatpush2.msra.mxu0 0.0
        %606 = vmatprep.subr.mxu0 0.0
        %607 = vmatpush2.msra.mxu0 0.0
        %608 = vmatprep.subr.mxu0 0.0
        %609 = vmatpush2.msra.mxu0 0.0
        %610 = vmatprep.subr.mxu0 0.0
        %611 = vmatpush2.msra.mxu0 0.0
        %612 = vmatprep.subr.mxu0 0.0
        %613 = vmatpush2.msra.mxu0 0.0
        %614 = vmatprep.subr.mxu0 0.0
        %615 = vmatpush2.msra.mxu0 0.0
        %616 = vmatprep.subr.mxu0 0.0
        %617 = vmatpush2.msra.mxu0 0.0
        %618 = vmatprep.subr.mxu0 0.0
        %619 = vmatpush2.msra.mxu0 0.0
        %620 = vmatprep.mubr.f32.mxu0 0.0
        %621 = vmatmul.mubr.f32.gmra.mxu0 %v481
        %v622 = vpop.f32.mrf.mxu0
        %v623 = vadd.f32 0.0, %v622
        %v624 = vpop.f32.mrf.mxu0
        %625 = vdwg.mxu0
        %vm626 = vcmp.lt.f32.partialorder %v623, %v207
        %vm627 = vmand %vm467, %vm626
        %v628 = vsel %vm627, 1, 0
        %v629 = vand.u32 %v628, 65535
        %v630 = vshrl.u32 %v628, 16
        %v631 = vcvt.s32.f32 %v629
        %v632 = vcvt.s32.f32 %v630
        %633 = vadd.xlane.f32.xlu0 %v631
        %v634 = vpop.xlane.xlu0 %633
        %635 = vadd.xlane.f32.xlu0 %v632
        %v636 = vpop.xlane.xlu0 %635
        %v637 = vcvt.f32.s32 %v634
        %v638 = vcvt.f32.s32 %v636
        %v639 = vshll.u32 %v638, 16
        %v640 = vadd.s32 %v639, %v637
        %vm641 = vcmp.lt.s32.totalorder %v640, 5
        %v642 = vsel %vm641, %v640, 5
        %vm643 = vcmp.eq.s32.totalorder %v466, %v642
        %v644 = vsel %vm643, %v479, 0.0
        %645 = vadd.xlane.f32.xlu0 %v644
        %v646 = vpop.xlane.xlu0 %645
        %v647 = vsel %vm487, %v490, 0.0
        %v648 = vadd.f32 %v481, %v647
        %vm649 = vcmp.eq.s32.totalorder %v466, 7
        %v650 = vsel %vm649, %v486, 0.0
        %v651 = vadd.f32 %v648, %v650
        %vm652 = vcmp.eq.s32.totalorder %v466, 8
        %v653 = vsel %vm652, %v646, 0.0
        %v654 = vadd.f32 %v651, %v653
        %vm655 = vcmp.eq.s32.totalorder %v466, 9
        %v656 = vcvt.s32.f32 %v642
        %v657 = vsel %vm655, %v656, 0.0
        %v658 = vadd.f32 %v654, %v657
        %659 = vst [vmem:[%s199] sm:$0xff] %v658
        %p660 = scmp.lt.s32.totalorder %s14, 1
        %s661 = scalar_select %p660, %s14, 1
        %s662 = smul.addr %s661, 8
        %s663 = scalar_lea.vmem %s2, %s662
        // Predicated region
        $region71: #{pixel_policy_forward.1} parent=61 // pred_check
          %p664 = pneg %p79
        $region72: #{pixel_policy_forward.1} parent=61 // pred_check_branch
          %666 = sbr.rel (%p664) target = $region74
        $region73: #{pixel_policy_forward.1} parent=61 // pred_region
          _
        $region74: #{pixel_policy_forward.1} parent=61 // pred_fallthru
          _
      $region62: #{pixel_policy_forward.1} parent=5 // pred_fallthru
        _
      %p667 = scmp.le.s32.totalorder 2, %s9
      // Predicated region
      $region75: #{pixel_policy_forward.1} parent=5 // pred_check
        %p668 = pneg %p667
      $region76: #{pixel_policy_forward.1} parent=5 // pred_check_branch
        %670 = sbr.rel (%p668) target = $region78
      $region77: #{pixel_policy_forward.1} parent=5 // pred_region
        %s671 = ssub.s32 %s9, 2
        // Predicated region
        $region79: #{pixel_policy_forward.1} parent=77 // pred_check
          %p672 = pneg %p85
        $region80: #{pixel_policy_forward.1} parent=77 // pred_check_branch
          %674 = sbr.rel (%p672) target = $region82
        $region81: #{pixel_policy_forward.1} parent=77 // pred_region
          %p675 = scmp.lt.s32.totalorder %s15, 1
          %s676 = scalar_select %p675, %s15, 1
          %s677 = smul.addr %s676, 8
          %s678 = scalar_lea.vmem %s2, %s677
        $region82: #{pixel_policy_forward.1} parent=77 // pred_fallthru
          _
      $region78: #{pixel_policy_forward.1} parent=5 // pred_fallthru
        _
    $region6: #{pixel_policy_forward.1} parent=1 // loop_footer
      %s13 = sadd.s32 1, %s9
    $region7: #{pixel_policy_forward.1} parent=1 // loop_footer_branch
      %8 = sbr.rel target = $region3
    $region8: #{pixel_policy_forward.1} parent=1 // loop_exit
      _
    %679 = vsyncpa [#allocation4], 1
    %s680 = scalar_lea.sflag [#allocation4], 1
    %681 = vsyncpa %s680, 1

</llo_original>
